<compile_context>
chip_gen: v7x
topology: tpu7x:2x2x1
jax: 0.10.0
libtpu: 0.0.40
codegen_flags: <defaults>
</compile_context>

<pallas_src>
import math
from functools import partial

import jax
import jax.numpy as jnp
from jax.experimental import pallas as pl
from jax.experimental.pallas import tpu as pltpu


def _round_up(x, m):
    return ((x + m - 1) // m) * m


def make_pe_table(dim, max_len=5000, dtype=jnp.float32):
    """Builds the sin/cos positional-encoding table as a 2-D (max_len, dim) array.

    (The PyTorch buffer is (max_len, 1, dim); the batch broadcast happens inside
    the kernel instead, so pe HBM traffic stays 1/B of emb traffic.)
    """
    if dim % 2 != 0:
        raise ValueError(
            f"Cannot use sin/cos positional encoding with odd dim (got dim={dim})")
    position = jnp.arange(0, max_len, dtype=jnp.float32)[:, None]          # (max_len, 1)
    div_term = jnp.exp(jnp.arange(0, dim, 2, dtype=jnp.float32)
                       * -(math.log(10000.0) / dim))                       # (dim/2,)
    pe = jnp.zeros((max_len, dim), jnp.float32)
    pe = pe.at[:, 0::2].set(jnp.sin(position * div_term))
    pe = pe.at[:, 1::2].set(jnp.cos(position * div_term))
    return pe.astype(dtype)                                                # (max_len, dim)


def _choose_tile_s(S, B, D, itemsize):
    """Sequence-tile size: ~2 MiB per emb/out block, multiple of 8 sublanes.

    Resident VMEM ~= 2*(emb block) + 2*(out block) + 2*(pe block) which stays
    well under the 32 MiB scoped default on v5e/v6e/v7x for typical B*D.
    """
    target_bytes = 2 * 1024 * 1024
    row_bytes = max(1, B * D * itemsize)
    tile = max(8, min(target_bytes // row_bytes, 1024))
    tile = max(8, (tile // 8) * 8)          # sublane-aligned
    return min(tile, _round_up(S, 8))       # never bigger than (padded) S


def _pos_enc_kernel(scale, emb_ref, pe_ref, o_ref):
    # emb_ref: (TILE_S, B, D); pe_ref: (TILE_S, D) [encoder] or (1, D) [decode].
    x = emb_ref[...].astype(jnp.float32) * scale
    pe = jax.lax.broadcast_in_dim(
        pe_ref[...].astype(jnp.float32), x.shape, (0, 2))  # broadcast over batch (and S for decode)
    o_ref[...] = (x + pe).astype(o_ref.dtype)


def _pos_enc_step_kernel(scale, step_ref, emb_ref, pe_ref, o_ref):
    # step_ref (scalar-prefetch SMEM ref) is only consumed by the BlockSpec index_map.
    del step_ref
    _pos_enc_kernel(scale, emb_ref, pe_ref, o_ref)


def positional_encoding_forward(emb, pe_table, dim, step=None, *, force_pallas=False):
    """emb: (S, B, D); pe_table: (max_len, D). Returns emb*sqrt(dim) + pe[:S] or + pe[step]."""
    S, B, D = emb.shape
    assert pe_table.ndim == 2 and pe_table.shape[1] == D
    max_len = pe_table.shape[0]
    scale = float(math.sqrt(dim))

    # Tiny shapes: launch + per-step overhead dwarfs the work; let XLA fuse it.
    if not force_pallas and S * B * D < (1 << 16):
        if step is None:
            return (emb * scale + pe_table[:S][:, None, :]).astype(emb.dtype)
        row = jnp.clip(jnp.asarray(step, jnp.int32), 0, max_len - 1)
        return (emb * scale + pe_table[row][None, None, :]).astype(emb.dtype)

    tile_s = _choose_tile_s(S, B, D, jnp.dtype(emb.dtype).itemsize)
    s_pad = _round_up(S, tile_s)
    emb_p = emb if s_pad == S else jnp.pad(emb, ((0, s_pad - S), (0, 0), (0, 0)))
    grid = (s_pad // tile_s,)
    out_shape = jax.ShapeDtypeStruct((s_pad, B, D), emb.dtype)
    compiler_params = pltpu.CompilerParams(dimension_semantics=("parallel",))

    if step is None:
        pe = pe_table[:min(s_pad, max_len)]
        if pe.shape[0] < s_pad:  # padded tail rows get zeros (sliced away below)
            pe = jnp.pad(pe, ((0, s_pad - pe.shape[0]), (0, 0)))
        out = pl.pallas_call(
            partial(_pos_enc_kernel, scale),
            out_shape=out_shape,
            grid_spec=pltpu.PrefetchScalarGridSpec(
                num_scalar_prefetch=0,
                grid=grid,
                in_specs=[
                    pl.BlockSpec((tile_s, B, D), lambda s: (s, 0, 0)),
                    pl.BlockSpec((tile_s, D), lambda s: (s, 0)),
                ],
                out_specs=pl.BlockSpec((tile_s, B, D), lambda s: (s, 0, 0)),
            ),
            compiler_params=compiler_params,
        )(emb_p, pe)
    else:
        # Decode path: pe row is picked via scalar prefetch inside the index_map.
        step_arr = jnp.clip(jnp.asarray(step, jnp.int32).reshape((1,)), 0, max_len - 1)
        out = pl.pallas_call(
            partial(_pos_enc_step_kernel, scale),
            out_shape=out_shape,
            grid_spec=pltpu.PrefetchScalarGridSpec(
                num_scalar_prefetch=1,
                grid=grid,
                in_specs=[
                    pl.BlockSpec((tile_s, B, D), lambda s, st: (s, 0, 0)),
                    pl.BlockSpec((1, D), lambda s, st: (st[0], 0)),
                ],
                out_specs=pl.BlockSpec((tile_s, B, D), lambda s, st: (s, 0, 0)),
            ),
            compiler_params=compiler_params,
        )(step_arr, emb_p, pe_table)

    if s_pad != S:
        out = out[:S]
    # TODO(synk): training-mode dropout omitted (identity / eval semantics).
    return out


if __name__ == "__main__":
    SEQ, BATCH, DIM = 8, 2, 32
    MAX_LEN = 64

    key = jax.random.PRNGKey(0)
    emb = jax.random.normal(key, (SEQ, BATCH, DIM), dtype=jnp.float32)
    pe_table = make_pe_table(DIM, max_len=MAX_LEN, dtype=jnp.float32)

    # Encoder path (step=None).
    out = positional_encoding_forward(emb, pe_table, DIM, step=None, force_pallas=True)
    out = jax.block_until_ready(out)
    ref = emb * math.sqrt(DIM) + pe_table[:SEQ][:, None, :]
    assert out.shape == emb.shape and out.dtype == emb.dtype
    assert jnp.allclose(out, ref, atol=1e-5, rtol=1e-5)

    # Decode path (step=3): pe[step] is added to every position via scalar prefetch.
    out_step = positional_encoding_forward(emb, pe_table, DIM, step=3, force_pallas=True)
    out_step = jax.block_until_ready(out_step)
    ref_step = emb * math.sqrt(DIM) + pe_table[3][None, None, :]
    assert jnp.allclose(out_step, ref_step, atol=1e-5, rtol=1e-5)

    print("KERNEL_OK")
</pallas_src>

<mosaic_0001>
module attributes {stable_mosaic.version = 11 : i64} {
  func.func @_pos_enc_kernel(%arg0: i32, %arg1: memref<8x2x32xf32, #tpu.memory_space<vmem>>, %arg2: memref<8x32xf32, #tpu.memory_space<vmem>>, %arg3: memref<8x2x32xf32, #tpu.memory_space<vmem>>) attributes {dimension_semantics = [#tpu.dimension_semantics<parallel>], iteration_bounds = array<i64: 1>, scalar_prefetch = 0 : i64, scratch_operands = 0 : i64, tpu.core_type = #tpu.core_type<tc>, window_params = [{transform_indices = @transform_0, window_bounds = array<i64: 8, 2, 32>}, {transform_indices = @transform_1, window_bounds = array<i64: 8, 32>}, {transform_indices = @transform_2, window_bounds = array<i64: 8, 2, 32>}]} {
    %c0 = arith.constant 0 : index
    %c0_0 = arith.constant 0 : index
    %c0_1 = arith.constant 0 : index
    %0 = vector.load %arg1[%c0, %c0_0, %c0_1] : memref<8x2x32xf32, #tpu.memory_space<vmem>>, vector<8x2x32xf32>
    %cst = arith.constant 5.65685415 : f32
    %1 = vector.broadcast %cst : f32 to vector<8x2x32xf32>
    %2 = arith.mulf %0, %1 : vector<8x2x32xf32>
    %c0_2 = arith.constant 0 : index
    %c0_3 = arith.constant 0 : index
    %3 = vector.load %arg2[%c0_2, %c0_3] : memref<8x32xf32, #tpu.memory_space<vmem>>, vector<8x32xf32>
    %4 = vector.shape_cast %3 : vector<8x32xf32> to vector<8x1x32xf32>
    %5 = vector.broadcast %4 : vector<8x1x32xf32> to vector<8x2x32xf32>
    %6 = arith.addf %2, %5 : vector<8x2x32xf32>
    %c0_4 = arith.constant 0 : index
    %c0_5 = arith.constant 0 : index
    %c0_6 = arith.constant 0 : index
    %7 = vector.load %arg3[%c0_4, %c0_5, %c0_6] : memref<8x2x32xf32, #tpu.memory_space<vmem>>, vector<8x2x32xf32>
    tpu.vector_store %arg3[%c0_4, %c0_5, %c0_6], %6 {strides = array<i32>} : memref<8x2x32xf32, #tpu.memory_space<vmem>>, vector<8x2x32xf32>,
    return
  }
  func.func @transform_0(%arg0: i32) -> (i32, i32, i32) {
    %c0_i32 = arith.constant 0 : i32
    %c0_i32_0 = arith.constant 0 : i32
    %c0_i32_1 = arith.constant 0 : i32
    return %arg0, %c0_i32, %c0_i32_0 : i32, i32, i32
  }
  func.func @transform_1(%arg0: i32) -> (i32, i32) {
    %c0_i32 = arith.constant 0 : i32
    %c0_i32_0 = arith.constant 0 : i32
    return %arg0, %c0_i32 : i32, i32
  }
  func.func @transform_2(%arg0: i32) -> (i32, i32, i32) {
    %c0_i32 = arith.constant 0 : i32
    %c0_i32_0 = arith.constant 0 : i32
    %c0_i32_1 = arith.constant 0 : i32
    return %arg0, %c0_i32, %c0_i32_0 : i32, i32, i32
  }
}

</mosaic_0001>

<llo_original>
// kernel: tpu_custom_call.1
$region0: #{tpu_custom_call.1}
  #allocation0 [shape = 'u32[]', space=smem, size = 0x4, offset = 0x4, fixed_abs, tag = 'smem constant byte address 0x4 - core index']
  #allocation1 [shape = 'u32[144,128]{1,0:T(1,128)}', space=vmem, size = 0x12000, scoped, tag = 'internal scratch']
  %s0 = inlined_call_operand.hbm [shape: f32[8,2,32], index: 0, kind: input, shape index: {}]
  %s1 = inlined_call_operand.hbm [shape: f32[8,32], index: 1, kind: input, shape index: {}]
  %s2 = inlined_call_operand.hbm [shape: f32[8,2,32], index: 2, kind: output, shape index: {}]
  %s3 = sld [smem:[#allocation0]]
  $region26: #{tpu_custom_call.1} parent=0
    _
  %s5 = ssub.s32 1, %s3
  %s6 = scalar_select 0, %s5, %s3
  $region1: #{tpu_custom_call.1} parent=0
    #allocation2 [shape = 'u8[8192]{0}', space=vmem, size = 0x2000, scoped, tag = 'input window, operand 0, single buffered']
    #allocation3 [shape = 's32[1]{0}', space=sflag, size = 0x4, scoped, tag = 'scoped memory for tpu_custom_call.1']
    #allocation4 [shape = 's32[1]{0}', space=sflag, size = 0x4, scoped, tag = 'scoped memory for tpu_custom_call.1']
    #allocation5 [shape = 'u8[4096]{0}', space=vmem, size = 0x1000, scoped, tag = 'input window, operand 1, single buffered']
    #allocation6 [shape = 's32[1]{0}', space=sflag, size = 0x4, scoped, tag = 'scoped memory for tpu_custom_call.1']
    #allocation7 [shape = 'u8[8192]{0}', space=vmem, size = 0x2000, scoped, tag = 'output window, operand 0, single buffered']
    %7 = vsyncpa [#allocation3], 0
    %8 = vsyncpa [#allocation6], 0
    %9 = vsyncpa [#allocation4], 0
    // Predicated region
    $region2: #{tpu_custom_call.1} parent=1 // pred_check
      _
    $region3: #{tpu_custom_call.1} parent=1 // pred_check_branch
      %11 = sbr.rel (0) target = $region5
    $region4: #{tpu_custom_call.1} parent=1 // pred_region
      %s13 = ssub.s32 256, 256
      %14 = vsyncadd [#allocation3], %s13
      %s15 = sshll.u32 [#allocation2], 4
      %s16 = int_to_ptr.vmem [resolvable:$true] %s15
      %21 = dma.hbm_to_vmem [thread:$0]  %s0, 256, %s16, [#allocation3], 32, 32, 2
    $region5: #{tpu_custom_call.1} parent=1 // pred_fallthru
      _
    // Predicated region
    $region6: #{tpu_custom_call.1} parent=1 // pred_check
      _
    $region7: #{tpu_custom_call.1} parent=1 // pred_check_branch
      %23 = sbr.rel (0) target = $region9
    $region8: #{tpu_custom_call.1} parent=1 // pred_region
      %s25 = ssub.s32 128, 128
      %26 = vsyncadd [#allocation6], %s25
      %s28 = sshll.u32 [#allocation5], 4
      %s29 = int_to_ptr.vmem [resolvable:$true] %s28
      %31 = dma.hbm_to_vmem [thread:$0]  %s1, 128, %s29, [#allocation6]
    $region9: #{tpu_custom_call.1} parent=1 // pred_fallthru
      _
    // Predicated region
    $region10: #{tpu_custom_call.1} parent=1 // pred_check
      _
    $region11: #{tpu_custom_call.1} parent=1 // pred_check_branch
      %33 = sbr.rel (0) target = $region13
    $region12: #{tpu_custom_call.1} parent=1 // pred_region
      %34 = dma.done [#allocation3], 256
    $region13: #{tpu_custom_call.1} parent=1 // pred_fallthru
      _
    // Predicated region
    $region14: #{tpu_custom_call.1} parent=1 // pred_check
      _
    $region15: #{tpu_custom_call.1} parent=1 // pred_check_branch
      %36 = sbr.rel (0) target = $region17
    $region16: #{tpu_custom_call.1} parent=1 // pred_region
      %37 = dma.done [#allocation6], 128
    $region17: #{tpu_custom_call.1} parent=1 // pred_fallthru
      _
    %v38 = vld [vmem:[#allocation2] sm:$0x3]
    %v39 = vld [vmem:[#allocation2 + $0x2] sm:$0x3]
    %v40 = vld [vmem:[#allocation2 + $0x4] sm:$0x3]
    %v41 = vld [vmem:[#allocation2 + $0x6] sm:$0x3]
    %v42 = vld [vmem:[#allocation2 + $0x8] sm:$0x3]
    %v43 = vld [vmem:[#allocation2 + $0xa] sm:$0x3]
    %v44 = vld [vmem:[#allocation2 + $0xc] sm:$0x3]
    %v45 = vld [vmem:[#allocation2 + $0xe] sm:$0x3]
    %v46 = vmul.f32 %v38, 5.656854
    %v47 = vmul.f32 %v39, 5.656854
    %v48 = vmul.f32 %v40, 5.656854
    %v49 = vmul.f32 %v41, 5.656854
    %v50 = vmul.f32 %v42, 5.656854
    %v51 = vmul.f32 %v43, 5.656854
    %v52 = vmul.f32 %v44, 5.656854
    %v53 = vmul.f32 %v45, 5.656854
    %v54 = vld [vmem:[#allocation5] sm:$0xff]
    %v56 = vcombine.high %v54, %v54
    %v58 = vunpack.c.l.s4 1966171168
    %v59 = vunpack.c.0.s8 %v58
    %v60 = vlaneseq
    %v61 = vshrl.u32 %v60, 7
    %v62 = vsub.s32 %v59, %v61
    %v63 = vrot.slane %v54, %v62
    %v65 = vunpack.c.l.s4 1966171168
    %v66 = vunpack.c.0.s8 %v65
    %v67 = vlaneseq
    %v68 = vshrl.u32 %v67, 7
    %v69 = vsub.s32 %v66, %v68
    %v70 = vrot.slane %v56, %v69
    %v71 = vcombine.high %v63, %v63
    %v72 = vcombine.high %v70, %v70
    %v74 = vunpack.c.l.s4 1966171168
    %v75 = vunpack.c.0.s8 %v74
    %v76 = vlaneseq
    %v77 = vshrl.u32 %v76, 7
    %v78 = vsub.s32 %v75, %v77
    %v79 = vrot.slane %v63, %v78
    %v81 = vunpack.c.l.s4 1966171168
    %v82 = vunpack.c.0.s8 %v81
    %v83 = vlaneseq
    %v84 = vshrl.u32 %v83, 7
    %v85 = vsub.s32 %v82, %v84
    %v86 = vrot.slane %v70, %v85
    %v88 = vunpack.c.l.s4 1966171168
    %v89 = vunpack.c.0.s8 %v88
    %v90 = vlaneseq
    %v91 = vshrl.u32 %v90, 7
    %v92 = vsub.s32 %v89, %v91
    %v93 = vrot.slane %v71, %v92
    %v95 = vunpack.c.l.s4 1966171168
    %v96 = vunpack.c.0.s8 %v95
    %v97 = vlaneseq
    %v98 = vshrl.u32 %v97, 7
    %v99 = vsub.s32 %v96, %v98
    %v100 = vrot.slane %v72, %v99
    %v101 = vcombine.high %v79, %v79
    %v102 = vcombine.high %v86, %v86
    %v103 = vcombine.high %v93, %v93
    %v104 = vcombine.high %v100, %v100
    %v105 = vlaneseq
    %v106 = vshrl.u32 %v105, 7
    %v107 = vsub.s32 0, %v106
    %v108 = vrot.slane %v79, %v107
    %v109 = vlaneseq
    %v110 = vshrl.u32 %v109, 7
    %v111 = vsub.s32 0, %v110
    %v112 = vrot.slane %v93, %v111
    %v113 = vlaneseq
    %v114 = vshrl.u32 %v113, 7
    %v115 = vsub.s32 0, %v114
    %v116 = vrot.slane %v101, %v115
    %v117 = vlaneseq
    %v118 = vshrl.u32 %v117, 7
    %v119 = vsub.s32 0, %v118
    %v120 = vrot.slane %v103, %v119
    %v121 = vlaneseq
    %v122 = vshrl.u32 %v121, 7
    %v123 = vsub.s32 0, %v122
    %v124 = vrot.slane %v86, %v123
    %v125 = vlaneseq
    %v126 = vshrl.u32 %v125, 7
    %v127 = vsub.s32 0, %v126
    %v128 = vrot.slane %v100, %v127
    %v129 = vlaneseq
    %v130 = vshrl.u32 %v129, 7
    %v131 = vsub.s32 0, %v130
    %v132 = vrot.slane %v102, %v131
    %v133 = vlaneseq
    %v134 = vshrl.u32 %v133, 7
    %v135 = vsub.s32 0, %v134
    %v136 = vrot.slane %v104, %v135
    %v145 = vadd.f32 %v46, %v108
    %v146 = vadd.f32 %v47, %v112
    %v147 = vadd.f32 %v48, %v116
    %v148 = vadd.f32 %v49, %v120
    %v149 = vadd.f32 %v50, %v124
    %v150 = vadd.f32 %v51, %v128
    %v151 = vadd.f32 %v52, %v132
    %v152 = vadd.f32 %v53, %v136
    %vm153 = vcmask 254976
    %154 = vst.msk [vmem:[#allocation7] sm:$0x3] %vm153, %v145
    %155 = vst.msk [vmem:[#allocation7 + $0x2] sm:$0x3] %vm153, %v146
    %156 = vst.msk [vmem:[#allocation7 + $0x4] sm:$0x3] %vm153, %v147
    %157 = vst.msk [vmem:[#allocation7 + $0x6] sm:$0x3] %vm153, %v148
    %158 = vst.msk [vmem:[#allocation7 + $0x8] sm:$0x3] %vm153, %v149
    %159 = vst.msk [vmem:[#allocation7 + $0xa] sm:$0x3] %vm153, %v150
    %160 = vst.msk [vmem:[#allocation7 + $0xc] sm:$0x3] %vm153, %v151
    %161 = vst.msk [vmem:[#allocation7 + $0xe] sm:$0x3] %vm153, %v152
    // Predicated region
    $region18: #{tpu_custom_call.1} parent=1 // pred_check
      _
    $region19: #{tpu_custom_call.1} parent=1 // pred_check_branch
      %163 = sbr.rel (0) target = $region21
    $region20: #{tpu_custom_call.1} parent=1 // pred_region
      %s165 = ssub.s32 256, 256
      %166 = vsyncadd [#allocation4], %s165
      %s167 = sshll.u32 [#allocation7], 4
      %s168 = int_to_ptr.vmem [resolvable:$true] %s167
      %173 = dma.vmem_to_hbm [thread:$0]  %s168, 256, %s2, [#allocation4], 32, 32, 2
    $region21: #{tpu_custom_call.1} parent=1 // pred_fallthru
      _
    // Predicated region
    $region22: #{tpu_custom_call.1} parent=1 // pred_check
      _
    $region23: #{tpu_custom_call.1} parent=1 // pred_check_branch
      %175 = sbr.rel (0) target = $region25
    $region24: #{tpu_custom_call.1} parent=1 // pred_region
      %176 = dma.done [#allocation4], 256
    $region25: #{tpu_custom_call.1} parent=1 // pred_fallthru
      _
    %177 = vsyncpa [#allocation3], 1
    %178 = vsyncpa [#allocation6], 1
    %179 = vsyncpa [#allocation4], 1

</llo_original>
